<compile_context>
chip_gen: v7x
topology: tpu7x:2x2x1
jax: 0.10.0
libtpu: 0.0.40
codegen_flags: <defaults>
</compile_context>

<pallas_src>
import functools

import jax
import jax.numpy as jnp
from jax import lax
from jax.experimental import pallas as pl
from jax.experimental.pallas import tpu as pltpu

STATE_DIM = 2
HIDDEN = 10
OUT = 1

SUB = 8                  # f32 sublanes per vreg
LANE = 128               # lanes per vreg
GRANULE = SUB * LANE     # 1024: minimal lane/sublane-dense batch unit
CHUNK = 512              # lanes per inner compute chunk (4 vregs per (8, CHUNK) slab)


def mlp_kernel(w_ref, x_ref, o_ref):
    """One batch block of the MLP, computed on the VPU with full (8,128) vregs.

    w_ref: (3*HIDDEN,) f32, SMEM   [lay1.weight row-major (10,2), then lay2.weight (10,)]
    x_ref: (STATE_DIM, 8, L) f32, VMEM   (batch folded onto sublanes + lanes)
    o_ref: (8, L) f32, VMEM
    """
    # Hoist the 30 scalar weight loads out of the chunk loop.
    w1a = [w_ref[2 * j] for j in range(HIDDEN)]        # lay1.weight[j, 0]
    w1b = [w_ref[2 * j + 1] for j in range(HIDDEN)]    # lay1.weight[j, 1]
    w2 = [w_ref[2 * HIDDEN + j] for j in range(HIDDEN)]

    L = x_ref.shape[2]
    # L is always a multiple of 128; use 512-lane chunks when possible.
    chunk = CHUNK if (L % CHUNK == 0) else LANE
    n_chunks = L // chunk

    def body(c, carry):
        start = pl.multiple_of(c * chunk, chunk)
        x0 = x_ref[0, :, pl.ds(start, chunk)]          # (8, chunk)
        x1 = x_ref[1, :, pl.ds(start, chunk)]          # (8, chunk)
        # Unrolled over the 10 hidden units, everything stays in vregs.
        # Two accumulators break the serial add chain (VALU latency).
        acc0 = w2[0] * jnp.maximum(w1a[0] * x0 + w1b[0] * x1, 0.0)
        acc1 = w2[1] * jnp.maximum(w1a[1] * x0 + w1b[1] * x1, 0.0)
        for j in range(2, HIDDEN, 2):
            acc0 = acc0 + w2[j] * jnp.maximum(w1a[j] * x0 + w1b[j] * x1, 0.0)
            acc1 = acc1 + w2[j + 1] * jnp.maximum(
                w1a[j + 1] * x0 + w1b[j + 1] * x1, 0.0)
        # Lane-dense, unmasked store (chunk is a multiple of 128).
        o_ref[:, pl.ds(start, chunk)] = acc0 + acc1
        return carry

    lax.fori_loop(0, n_chunks, body, 0, unroll=min(2, n_chunks))


def _round_up(a, b):
    return ((a + b - 1) // b) * b


def _plan(batch, target_batch_per_step):
    """Pick (padded batch, lanes per grid step, number of grid steps)."""
    units = _round_up(max(batch, 1), GRANULE) // GRANULE
    per_step_target = max(1, target_batch_per_step // GRANULE)
    n_steps = pl.cdiv(units, per_step_target)
    if n_steps == 1 and units >= 2:
        n_steps = 2                                    # let v7x use both TCs
    per_step_units = pl.cdiv(units, n_steps)
    n_steps = pl.cdiv(units, per_step_units)           # drop empty trailing steps
    b_pad = per_step_units * n_steps * GRANULE
    return b_pad, per_step_units * LANE, n_steps


@functools.partial(jax.jit, static_argnames=("target_batch_per_step",))
def model_forward(x, w1, w2, *, target_batch_per_step=512 * 1024):
    """x: (B, STATE_DIM); w1: (HIDDEN, STATE_DIM); w2: (OUT, HIDDEN) -> (B, OUT).

    Numerically equal to relu(x @ w1.T) @ w2.T (fp32).
    """
    B = x.shape[0]
    x = x.astype(jnp.float32)
    w_flat = jnp.concatenate(
        [w1.astype(jnp.float32).reshape(-1), w2.astype(jnp.float32).reshape(-1)])

    b_pad, lanes_per_step, n_steps = _plan(B, target_batch_per_step)
    l_total = b_pad // SUB

    x_pad = x if b_pad == B else jnp.pad(x, ((0, b_pad - B), (0, 0)))
    # Fold batch onto (sublane, lane): x_t3[d, s, l] = x_pad[s * l_total + l, d].
    # allow_input_fusion lets XLA fuse this pad/transpose/reshape into the
    # pallas_call input DMA instead of a separate HBM round trip.
    x_t3 = x_pad.T.reshape(STATE_DIM, SUB, l_total)

    out = pl.pallas_call(
        mlp_kernel,
        out_shape=jax.ShapeDtypeStruct((SUB, l_total), jnp.float32),
        grid=(n_steps,),
        in_specs=[
            # 30 weight scalars: SMEM-resident across the whole grid.
            pl.BlockSpec(memory_space=pltpu.MemorySpace.SMEM),
            # Lane/sublane-dense activation blocks.
            pl.BlockSpec((STATE_DIM, SUB, lanes_per_step), lambda i: (0, 0, i)),
        ],
        out_specs=pl.BlockSpec((SUB, lanes_per_step), lambda i: (0, i)),
        compiler_params=pltpu.CompilerParams(
            # Batch blocks are independent -> shard across TCs on v7x megacore.
            dimension_semantics=("parallel",),
            # Let XLA fuse the input pad/transpose/reshape into the call.
            allow_input_fusion=[False, True],
            # ~12 MiB double-buffered footprint; raise above v5e's 16 MiB default.
            vmem_limit_bytes=32 * 1024 * 1024,
        ),
        cost_estimate=pl.CostEstimate(
            flops=6 * HIDDEN * b_pad,
            transcendentals=0,
            bytes_accessed=(STATE_DIM + OUT) * 4 * b_pad + 4 * 3 * HIDDEN,
        ),
    )(w_flat, x_t3)

    # (8, l_total) -> (b_pad,) is a free row-major reshape; strip padding.
    return out.reshape(b_pad)[:B].reshape(B, OUT)


def reference_forward(x, w1, w2):
    h = jnp.maximum(x @ w1.T, 0.0)
    return h @ w2.T


if __name__ == "__main__":
    key = jax.random.PRNGKey(0)
    k_x, k_w1, k_w2, k_x2, k_x3 = jax.random.split(key, 5)

    # Deterministic parameters mimicking weight.data.normal_(0, 0.5).
    w1 = 0.5 * jax.random.normal(k_w1, (HIDDEN, STATE_DIM), dtype=jnp.float32)
    w2 = 0.5 * jax.random.normal(k_w2, (OUT, HIDDEN), dtype=jnp.float32)

    # Small batch consistent with the module's (B, state_dim=2) input.
    B = 8
    x = jax.random.normal(k_x, (B, STATE_DIM), dtype=jnp.float32)
    out = jax.block_until_ready(model_forward(x, w1, w2))
    ref = reference_forward(x, w1, w2)
    assert out.shape == (B, OUT)
    assert jnp.allclose(out, ref, atol=1e-5, rtol=1e-5), "mismatch (B=8)"

    # Padding + multi-step grid + 128-lane chunk path (B not a multiple of 1024).
    B2 = 3000
    x2 = jax.random.normal(k_x2, (B2, STATE_DIM), dtype=jnp.float32)
    out2 = jax.block_until_ready(
        model_forward(x2, w1, w2, target_batch_per_step=2048))
    ref2 = reference_forward(x2, w1, w2)
    assert out2.shape == (B2, OUT)
    assert jnp.allclose(out2, ref2, atol=1e-4, rtol=1e-4), "mismatch (B=3000)"

    # Default sizing path: 2 grid steps, 512-lane chunks, no padding.
    B3 = 32768
    x3 = jax.random.normal(k_x3, (B3, STATE_DIM), dtype=jnp.float32)
    out3 = jax.block_until_ready(model_forward(x3, w1, w2))
    ref3 = reference_forward(x3, w1, w2)
    assert out3.shape == (B3, OUT)
    assert jnp.allclose(out3, ref3, atol=1e-4, rtol=1e-4), "mismatch (B=32768)"

    print("KERNEL_OK")
</pallas_src>

<mosaic_0001>
module attributes {stable_mosaic.version = 11 : i64} {
  func.func @mlp_kernel(%arg0: i32, %arg1: memref<30xf32, #tpu.memory_space<smem>>, %arg2: memref<2x8x128xf32, #tpu.memory_space<vmem>>, %arg3: memref<8x128xf32, #tpu.memory_space<vmem>>) attributes {dimension_semantics = [#tpu.dimension_semantics<parallel>], iteration_bounds = array<i64: 1>, scalar_prefetch = 0 : i64, scratch_operands = 0 : i64, tpu.core_type = #tpu.core_type<tc>, window_params = [{transform_indices = @transform_0, window_bounds = array<i64: 30>}, {transform_indices = @transform_1, window_bounds = array<i64: 2, 8, 128>}, {transform_indices = @transform_2, window_bounds = array<i64: 8, 128>}]} {
    %c0 = arith.constant 0 : index
    %0 = memref.load %arg1[%c0] : memref<30xf32, #tpu.memory_space<smem>>
    %c2 = arith.constant 2 : index
    %1 = memref.load %arg1[%c2] : memref<30xf32, #tpu.memory_space<smem>>
    %c4 = arith.constant 4 : index
    %2 = memref.load %arg1[%c4] : memref<30xf32, #tpu.memory_space<smem>>
    %c6 = arith.constant 6 : index
    %3 = memref.load %arg1[%c6] : memref<30xf32, #tpu.memory_space<smem>>
    %c8 = arith.constant 8 : index
    %4 = memref.load %arg1[%c8] : memref<30xf32, #tpu.memory_space<smem>>
    %c10 = arith.constant 10 : index
    %5 = memref.load %arg1[%c10] : memref<30xf32, #tpu.memory_space<smem>>
    %c12 = arith.constant 12 : index
    %6 = memref.load %arg1[%c12] : memref<30xf32, #tpu.memory_space<smem>>
    %c14 = arith.constant 14 : index
    %7 = memref.load %arg1[%c14] : memref<30xf32, #tpu.memory_space<smem>>
    %c16 = arith.constant 16 : index
    %8 = memref.load %arg1[%c16] : memref<30xf32, #tpu.memory_space<smem>>
    %c18 = arith.constant 18 : index
    %9 = memref.load %arg1[%c18] : memref<30xf32, #tpu.memory_space<smem>>
    %c1 = arith.constant 1 : index
    %10 = memref.load %arg1[%c1] : memref<30xf32, #tpu.memory_space<smem>>
    %c3 = arith.constant 3 : index
    %11 = memref.load %arg1[%c3] : memref<30xf32, #tpu.memory_space<smem>>
    %c5 = arith.constant 5 : index
    %12 = memref.load %arg1[%c5] : memref<30xf32, #tpu.memory_space<smem>>
    %c7 = arith.constant 7 : index
    %13 = memref.load %arg1[%c7] : memref<30xf32, #tpu.memory_space<smem>>
    %c9 = arith.constant 9 : index
    %14 = memref.load %arg1[%c9] : memref<30xf32, #tpu.memory_space<smem>>
    %c11 = arith.constant 11 : index
    %15 = memref.load %arg1[%c11] : memref<30xf32, #tpu.memory_space<smem>>
    %c13 = arith.constant 13 : index
    %16 = memref.load %arg1[%c13] : memref<30xf32, #tpu.memory_space<smem>>
    %c15 = arith.constant 15 : index
    %17 = memref.load %arg1[%c15] : memref<30xf32, #tpu.memory_space<smem>>
    %c17 = arith.constant 17 : index
    %18 = memref.load %arg1[%c17] : memref<30xf32, #tpu.memory_space<smem>>
    %c19 = arith.constant 19 : index
    %19 = memref.load %arg1[%c19] : memref<30xf32, #tpu.memory_space<smem>>
    %c20 = arith.constant 20 : index
    %20 = memref.load %arg1[%c20] : memref<30xf32, #tpu.memory_space<smem>>
    %c21 = arith.constant 21 : index
    %21 = memref.load %arg1[%c21] : memref<30xf32, #tpu.memory_space<smem>>
    %c22 = arith.constant 22 : index
    %22 = memref.load %arg1[%c22] : memref<30xf32, #tpu.memory_space<smem>>
    %c23 = arith.constant 23 : index
    %23 = memref.load %arg1[%c23] : memref<30xf32, #tpu.memory_space<smem>>
    %c24 = arith.constant 24 : index
    %24 = memref.load %arg1[%c24] : memref<30xf32, #tpu.memory_space<smem>>
    %c25 = arith.constant 25 : index
    %25 = memref.load %arg1[%c25] : memref<30xf32, #tpu.memory_space<smem>>
    %c26 = arith.constant 26 : index
    %26 = memref.load %arg1[%c26] : memref<30xf32, #tpu.memory_space<smem>>
    %c27 = arith.constant 27 : index
    %27 = memref.load %arg1[%c27] : memref<30xf32, #tpu.memory_space<smem>>
    %c28 = arith.constant 28 : index
    %28 = memref.load %arg1[%c28] : memref<30xf32, #tpu.memory_space<smem>>
    %c29 = arith.constant 29 : index
    %29 = memref.load %arg1[%c29] : memref<30xf32, #tpu.memory_space<smem>>
    %c0_i32 = arith.constant 0 : i32
    %c128_i32 = arith.constant 128 : i32
    %30 = arith.muli %c0_i32, %c128_i32 : i32
    %31 = tpu.assume_multiple %30, 128 : i32
    %c0_0 = arith.constant 0 : index
    %c0_1 = arith.constant 0 : index
    %32 = arith.index_cast %31 : i32 to index
    %33 = vector.load %arg2[%c0_0, %c0_1, %32] : memref<2x8x128xf32, #tpu.memory_space<vmem>>, vector<1x8x128xf32>
    %34 = vector.shape_cast %33 : vector<1x8x128xf32> to vector<8x128xf32>
    %c1_2 = arith.constant 1 : index
    %c0_3 = arith.constant 0 : index
    %35 = arith.index_cast %31 : i32 to index
    %36 = vector.load %arg2[%c1_2, %c0_3, %35] : memref<2x8x128xf32, #tpu.memory_space<vmem>>, vector<1x8x128xf32>
    %37 = vector.shape_cast %36 : vector<1x8x128xf32> to vector<8x128xf32>
    %38 = vector.broadcast %0 : f32 to vector<8x128xf32>
    %39 = arith.mulf %38, %34 : vector<8x128xf32>
    %40 = vector.broadcast %10 : f32 to vector<8x128xf32>
    %41 = arith.mulf %40, %37 : vector<8x128xf32>
    %42 = arith.addf %39, %41 : vector<8x128xf32>
    %cst = arith.constant 0.000000e+00 : f32
    %43 = vector.broadcast %cst : f32 to vector<8x128xf32>
    %44 = arith.maximumf %42, %43 : vector<8x128xf32>
    %45 = vector.broadcast %20 : f32 to vector<8x128xf32>
    %46 = arith.mulf %45, %44 : vector<8x128xf32>
    %47 = vector.broadcast %1 : f32 to vector<8x128xf32>
    %48 = arith.mulf %47, %34 : vector<8x128xf32>
    %49 = vector.broadcast %11 : f32 to vector<8x128xf32>
    %50 = arith.mulf %49, %37 : vector<8x128xf32>
    %51 = arith.addf %48, %50 : vector<8x128xf32>
    %cst_4 = arith.constant 0.000000e+00 : f32
    %52 = vector.broadcast %cst_4 : f32 to vector<8x128xf32>
    %53 = arith.maximumf %51, %52 : vector<8x128xf32>
    %54 = vector.broadcast %21 : f32 to vector<8x128xf32>
    %55 = arith.mulf %54, %53 : vector<8x128xf32>
    %56 = vector.broadcast %2 : f32 to vector<8x128xf32>
    %57 = arith.mulf %56, %34 : vector<8x128xf32>
    %58 = vector.broadcast %12 : f32 to vector<8x128xf32>
    %59 = arith.mulf %58, %37 : vector<8x128xf32>
    %60 = arith.addf %57, %59 : vector<8x128xf32>
    %cst_5 = arith.constant 0.000000e+00 : f32
    %61 = vector.broadcast %cst_5 : f32 to vector<8x128xf32>
    %62 = arith.maximumf %60, %61 : vector<8x128xf32>
    %63 = vector.broadcast %22 : f32 to vector<8x128xf32>
    %64 = arith.mulf %63, %62 : vector<8x128xf32>
    %65 = arith.addf %46, %64 : vector<8x128xf32>
    %66 = vector.broadcast %3 : f32 to vector<8x128xf32>
    %67 = arith.mulf %66, %34 : vector<8x128xf32>
    %68 = vector.broadcast %13 : f32 to vector<8x128xf32>
    %69 = arith.mulf %68, %37 : vector<8x128xf32>
    %70 = arith.addf %67, %69 : vector<8x128xf32>
    %cst_6 = arith.constant 0.000000e+00 : f32
    %71 = vector.broadcast %cst_6 : f32 to vector<8x128xf32>
    %72 = arith.maximumf %70, %71 : vector<8x128xf32>
    %73 = vector.broadcast %23 : f32 to vector<8x128xf32>
    %74 = arith.mulf %73, %72 : vector<8x128xf32>
    %75 = arith.addf %55, %74 : vector<8x128xf32>
    %76 = vector.broadcast %4 : f32 to vector<8x128xf32>
    %77 = arith.mulf %76, %34 : vector<8x128xf32>
    %78 = vector.broadcast %14 : f32 to vector<8x128xf32>
    %79 = arith.mulf %78, %37 : vector<8x128xf32>
    %80 = arith.addf %77, %79 : vector<8x128xf32>
    %cst_7 = arith.constant 0.000000e+00 : f32
    %81 = vector.broadcast %cst_7 : f32 to vector<8x128xf32>
    %82 = arith.maximumf %80, %81 : vector<8x128xf32>
    %83 = vector.broadcast %24 : f32 to vector<8x128xf32>
    %84 = arith.mulf %83, %82 : vector<8x128xf32>
    %85 = arith.addf %65, %84 : vector<8x128xf32>
    %86 = vector.broadcast %5 : f32 to vector<8x128xf32>
    %87 = arith.mulf %86, %34 : vector<8x128xf32>
    %88 = vector.broadcast %15 : f32 to vector<8x128xf32>
    %89 = arith.mulf %88, %37 : vector<8x128xf32>
    %90 = arith.addf %87, %89 : vector<8x128xf32>
    %cst_8 = arith.constant 0.000000e+00 : f32
    %91 = vector.broadcast %cst_8 : f32 to vector<8x128xf32>
    %92 = arith.maximumf %90, %91 : vector<8x128xf32>
    %93 = vector.broadcast %25 : f32 to vector<8x128xf32>
    %94 = arith.mulf %93, %92 : vector<8x128xf32>
    %95 = arith.addf %75, %94 : vector<8x128xf32>
    %96 = vector.broadcast %6 : f32 to vector<8x128xf32>
    %97 = arith.mulf %96, %34 : vector<8x128xf32>
    %98 = vector.broadcast %16 : f32 to vector<8x128xf32>
    %99 = arith.mulf %98, %37 : vector<8x128xf32>
    %100 = arith.addf %97, %99 : vector<8x128xf32>
    %cst_9 = arith.constant 0.000000e+00 : f32
    %101 = vector.broadcast %cst_9 : f32 to vector<8x128xf32>
    %102 = arith.maximumf %100, %101 : vector<8x128xf32>
    %103 = vector.broadcast %26 : f32 to vector<8x128xf32>
    %104 = arith.mulf %103, %102 : vector<8x128xf32>
    %105 = arith.addf %85, %104 : vector<8x128xf32>
    %106 = vector.broadcast %7 : f32 to vector<8x128xf32>
    %107 = arith.mulf %106, %34 : vector<8x128xf32>
    %108 = vector.broadcast %17 : f32 to vector<8x128xf32>
    %109 = arith.mulf %108, %37 : vector<8x128xf32>
    %110 = arith.addf %107, %109 : vector<8x128xf32>
    %cst_10 = arith.constant 0.000000e+00 : f32
    %111 = vector.broadcast %cst_10 : f32 to vector<8x128xf32>
    %112 = arith.maximumf %110, %111 : vector<8x128xf32>
    %113 = vector.broadcast %27 : f32 to vector<8x128xf32>
    %114 = arith.mulf %113, %112 : vector<8x128xf32>
    %115 = arith.addf %95, %114 : vector<8x128xf32>
    %116 = vector.broadcast %8 : f32 to vector<8x128xf32>
    %117 = arith.mulf %116, %34 : vector<8x128xf32>
    %118 = vector.broadcast %18 : f32 to vector<8x128xf32>
    %119 = arith.mulf %118, %37 : vector<8x128xf32>
    %120 = arith.addf %117, %119 : vector<8x128xf32>
    %cst_11 = arith.constant 0.000000e+00 : f32
    %121 = vector.broadcast %cst_11 : f32 to vector<8x128xf32>
    %122 = arith.maximumf %120, %121 : vector<8x128xf32>
    %123 = vector.broadcast %28 : f32 to vector<8x128xf32>
    %124 = arith.mulf %123, %122 : vector<8x128xf32>
    %125 = arith.addf %105, %124 : vector<8x128xf32>
    %126 = vector.broadcast %9 : f32 to vector<8x128xf32>
    %127 = arith.mulf %126, %34 : vector<8x128xf32>
    %128 = vector.broadcast %19 : f32 to vector<8x128xf32>
    %129 = arith.mulf %128, %37 : vector<8x128xf32>
    %130 = arith.addf %127, %129 : vector<8x128xf32>
    %cst_12 = arith.constant 0.000000e+00 : f32
    %131 = vector.broadcast %cst_12 : f32 to vector<8x128xf32>
    %132 = arith.maximumf %130, %131 : vector<8x128xf32>
    %133 = vector.broadcast %29 : f32 to vector<8x128xf32>
    %134 = arith.mulf %133, %132 : vector<8x128xf32>
    %135 = arith.addf %115, %134 : vector<8x128xf32>
    %136 = arith.addf %125, %135 : vector<8x128xf32>
    %c0_13 = arith.constant 0 : index
    %137 = arith.index_cast %31 : i32 to index
    %138 = vector.load %arg3[%c0_13, %137] : memref<8x128xf32, #tpu.memory_space<vmem>>, vector<8x128xf32>
    tpu.vector_store %arg3[%c0_13, %137], %136 {strides = array<i32>} : memref<8x128xf32, #tpu.memory_space<vmem>>, vector<8x128xf32>,
    %c1_i32 = arith.constant 1 : i32
    return
  }
  func.func @transform_0(%arg0: i32) -> i32 {
    %c0_i32 = arith.constant 0 : i32
    %c0_i32_0 = arith.constant 0 : i32
    return %c0_i32 : i32
  }
  func.func @transform_1(%arg0: i32) -> (i32, i32, i32) {
    %c0_i32 = arith.constant 0 : i32
    %c0_i32_0 = arith.constant 0 : i32
    %c0_i32_1 = arith.constant 0 : i32
    return %c0_i32, %c0_i32_0, %arg0 : i32, i32, i32
  }
  func.func @transform_2(%arg0: i32) -> (i32, i32) {
    %c0_i32 = arith.constant 0 : i32
    %c0_i32_0 = arith.constant 0 : i32
    return %c0_i32, %arg0 : i32, i32
  }
}

</mosaic_0001>

<llo_original>
// kernel: model_forward.2
$region0: #{model_forward.2}
  #allocation0 [shape = 'u32[]', space=smem, size = 0x4, offset = 0x4, fixed_abs, tag = 'smem constant byte address 0x4 - core index']
  #allocation1 [shape = 'u32[144,128]{1,0:T(1,128)}', space=vmem, size = 0x12000, scoped, tag = 'internal scratch']
  %s0 = inlined_call_operand.vmem [shape: f32[30], index: 0, kind: input, shape index: {}]
  %s1 = inlined_call_operand.vmem [shape: f32[1,2,8,128], index: 1, kind: input, shape index: {}]
  %s2 = inlined_call_operand.vmem [shape: f32[8,128], index: 2, kind: output, shape index: {}]
  %s3 = sld [smem:[#allocation0]]
  $region22: #{model_forward.2} parent=0
    _
  %s5 = ssub.s32 1, %s3
  %s6 = scalar_select 0, %s5, %s3
  $region1: #{model_forward.2} parent=0
    #allocation2 [shape = 'u8[512]{0}', space=smem, size = 0x200, scoped, tag = 'input window, operand 0, single buffered']
    #allocation3 [shape = 's32[1]{0}', space=sflag, size = 0x4, scoped, tag = 'scoped memory for model_forward.2']
    #allocation4 [shape = 'u8[8192]{0}', space=vmem, size = 0x2000, dematerialized = true, scoped, tag = 'FusionAdapter Buffer %fusion.1 = f32[2,8,128]{2,1,0:T(8,128)} fusion(%param_1.1), kind=kLoop, calls=%fused_computation.1.clone, metadata={op_name="jit(model_forward)/reshape" stack_frame_id=11}']
    %7 = vsyncpa [#allocation3], 0
    // Predicated region
    $region2: #{model_forward.2} parent=1 // pred_check
      _
    $region3: #{model_forward.2} parent=1 // pred_check_branch
      %9 = sbr.rel (0) target = $region5
    $region4: #{model_forward.2} parent=1 // pred_region
      %s11 = ssub.s32 16, 16
      %12 = vsyncadd [#allocation3], %s11
      %s14 = sshll.u32 %s0, 4
      %s15 = int_to_ptr.vmem [resolvable:$true] %s14
      %17 = dma.vmem_to_smem %s15, 16, [#allocation2], [#allocation3]
    $region5: #{model_forward.2} parent=1 // pred_fallthru
      _
    // Predicated region
    $region6: #{model_forward.2} parent=1 // pred_check
      _
    $region7: #{model_forward.2} parent=1 // pred_check_branch
      %19 = sbr.rel (0) target = $region9
    $region8: #{model_forward.2} parent=1 // pred_region
      _
    $region9: #{model_forward.2} parent=1 // pred_fallthru
      _
    // Predicated region
    $region10: #{model_forward.2} parent=1 // pred_check
      _
    $region11: #{model_forward.2} parent=1 // pred_check_branch
      %21 = sbr.rel (0) target = $region13
    $region12: #{model_forward.2} parent=1 // pred_region
      %22 = dma.done [#allocation3], 16
    $region13: #{model_forward.2} parent=1 // pred_fallthru
      _
    %23 = sfence
    %v24 = vld [vmem:[%s1] sm:$0xff]
    %26 = vst [vmem:[#allocation4] sm:$0xff] %v24
    %s27 = scalar_lea.vmem %s1, 8
    %v28 = vld [vmem:[%s27] sm:$0xff]
    %s29 = scalar_lea.vmem [#allocation4], 8
    %31 = vst [vmem:[%s29] sm:$0xff] %v28
    %s32 = sld [smem:[#allocation2]]
    %s33 = sld [smem:[#allocation2 + $0x2]]
    %s34 = sld [smem:[#allocation2 + $0x4]]
    %s35 = sld [smem:[#allocation2 + $0x6]]
    %s36 = sld [smem:[#allocation2 + $0x8]]
    %s37 = sld [smem:[#allocation2 + $0xa]]
    %s38 = sld [smem:[#allocation2 + $0xc]]
    %s39 = sld [smem:[#allocation2 + $0xe]]
    %s40 = sld [smem:[#allocation2 + $0x10]]
    %s41 = sld [smem:[#allocation2 + $0x12]]
    %s42 = sld [smem:[#allocation2 + $0x1]]
    %s43 = sld [smem:[#allocation2 + $0x3]]
    %s44 = sld [smem:[#allocation2 + $0x5]]
    %s45 = sld [smem:[#allocation2 + $0x7]]
    %s46 = sld [smem:[#allocation2 + $0x9]]
    %s47 = sld [smem:[#allocation2 + $0xb]]
    %s48 = sld [smem:[#allocation2 + $0xd]]
    %s49 = sld [smem:[#allocation2 + $0xf]]
    %s50 = sld [smem:[#allocation2 + $0x11]]
    %s51 = sld [smem:[#allocation2 + $0x13]]
    %s52 = sld [smem:[#allocation2 + $0x14]]
    %s53 = sld [smem:[#allocation2 + $0x15]]
    %s54 = sld [smem:[#allocation2 + $0x16]]
    %s55 = sld [smem:[#allocation2 + $0x17]]
    %s56 = sld [smem:[#allocation2 + $0x18]]
    %s57 = sld [smem:[#allocation2 + $0x19]]
    %s58 = sld [smem:[#allocation2 + $0x1a]]
    %s59 = sld [smem:[#allocation2 + $0x1b]]
    %s60 = sld [smem:[#allocation2 + $0x1c]]
    %s61 = sld [smem:[#allocation2 + $0x1d]]
    %v62 = vld [vmem:[#allocation4] sm:$0xff]
    %s63 = sadd.s32 0, 8
    %s64 = scalar_lea.vmem [#allocation4], %s63
    %v65 = vld [vmem:[%s64] sm:$0xff]
    %v66 = vstv %s32
    %v67 = vmul.f32 %v66, %v62
    %v68 = vstv %s42
    %v69 = vmul.f32 %v68, %v65
    %v70 = vadd.f32 %v67, %v69
    %v71 = vmax.f32 %v70, 0.0
    %v72 = vstv %s52
    %v73 = vmul.f32 %v72, %v71
    %v74 = vstv %s33
    %v75 = vmul.f32 %v74, %v62
    %v76 = vstv %s43
    %v77 = vmul.f32 %v76, %v65
    %v78 = vadd.f32 %v75, %v77
    %v79 = vmax.f32 %v78, 0.0
    %v80 = vstv %s53
    %v81 = vmul.f32 %v80, %v79
    %v82 = vstv %s34
    %v83 = vmul.f32 %v82, %v62
    %v84 = vstv %s44
    %v85 = vmul.f32 %v84, %v65
    %v86 = vadd.f32 %v83, %v85
    %v87 = vmax.f32 %v86, 0.0
    %v88 = vstv %s54
    %v89 = vmul.f32 %v88, %v87
    %v90 = vadd.f32 %v73, %v89
    %v91 = vstv %s35
    %v92 = vmul.f32 %v91, %v62
    %v93 = vstv %s45
    %v94 = vmul.f32 %v93, %v65
    %v95 = vadd.f32 %v92, %v94
    %v96 = vmax.f32 %v95, 0.0
    %v97 = vstv %s55
    %v98 = vmul.f32 %v97, %v96
    %v99 = vadd.f32 %v81, %v98
    %v100 = vstv %s36
    %v101 = vmul.f32 %v100, %v62
    %v102 = vstv %s46
    %v103 = vmul.f32 %v102, %v65
    %v104 = vadd.f32 %v101, %v103
    %v105 = vmax.f32 %v104, 0.0
    %v106 = vstv %s56
    %v107 = vmul.f32 %v106, %v105
    %v108 = vadd.f32 %v90, %v107
    %v109 = vstv %s37
    %v110 = vmul.f32 %v109, %v62
    %v111 = vstv %s47
    %v112 = vmul.f32 %v111, %v65
    %v113 = vadd.f32 %v110, %v112
    %v114 = vmax.f32 %v113, 0.0
    %v115 = vstv %s57
    %v116 = vmul.f32 %v115, %v114
    %v117 = vadd.f32 %v99, %v116
    %v118 = vstv %s38
    %v119 = vmul.f32 %v118, %v62
    %v120 = vstv %s48
    %v121 = vmul.f32 %v120, %v65
    %v122 = vadd.f32 %v119, %v121
    %v123 = vmax.f32 %v122, 0.0
    %v124 = vstv %s58
    %v125 = vmul.f32 %v124, %v123
    %v126 = vadd.f32 %v108, %v125
    %v127 = vstv %s39
    %v128 = vmul.f32 %v127, %v62
    %v129 = vstv %s49
    %v130 = vmul.f32 %v129, %v65
    %v131 = vadd.f32 %v128, %v130
    %v132 = vmax.f32 %v131, 0.0
    %v133 = vstv %s59
    %v134 = vmul.f32 %v133, %v132
    %v135 = vadd.f32 %v117, %v134
    %v136 = vstv %s40
    %v137 = vmul.f32 %v136, %v62
    %v138 = vstv %s50
    %v139 = vmul.f32 %v138, %v65
    %v140 = vadd.f32 %v137, %v139
    %v141 = vmax.f32 %v140, 0.0
    %v142 = vstv %s60
    %v143 = vmul.f32 %v142, %v141
    %v144 = vadd.f32 %v126, %v143
    %v145 = vstv %s41
    %v146 = vmul.f32 %v145, %v62
    %v147 = vstv %s51
    %v148 = vmul.f32 %v147, %v65
    %v149 = vadd.f32 %v146, %v148
    %v150 = vmax.f32 %v149, 0.0
    %v151 = vstv %s61
    %v152 = vmul.f32 %v151, %v150
    %v153 = vadd.f32 %v135, %v152
    %v154 = vadd.f32 %v144, %v153
    %155 = vst [vmem:[%s2] sm:$0xff] %v154
    // Predicated region
    $region14: #{model_forward.2} parent=1 // pred_check
      _
    $region15: #{model_forward.2} parent=1 // pred_check_branch
      %157 = sbr.rel (0) target = $region17
    $region16: #{model_forward.2} parent=1 // pred_region
      _
    $region17: #{model_forward.2} parent=1 // pred_fallthru
      _
    // Predicated region
    $region18: #{model_forward.2} parent=1 // pred_check
      _
    $region19: #{model_forward.2} parent=1 // pred_check_branch
      %159 = sbr.rel (0) target = $region21
    $region20: #{model_forward.2} parent=1 // pred_region
      _
    $region21: #{model_forward.2} parent=1 // pred_fallthru
      _
    %160 = vsyncpa [#allocation3], 1

</llo_original>
